<compile_context>
chip_gen: v7x
topology: tpu7x:2x2x1
jax: 0.10.0
libtpu: 0.0.40
codegen_flags: <defaults>
</compile_context>

<pallas_src>
import functools
import math

import jax
import jax.numpy as jnp
from jax.experimental import pallas as pl
from jax.experimental.pallas import tpu as pltpu


LB_SM = 0.2  # matches the module default


def _round_up(n, m):
    return (n + m - 1) // m * m


def _largest_divisor_leq(n, cap):
    for d in range(min(n, cap), 0, -1):
        if n % d == 0:
            return d
    return 1


def _abs_disc_kernel(x_ref, lab_ref, mul_ref, o_ref, acc_ref, *, inv_b):
    # x_ref / lab_ref : (tb, ts, 128) tiles (native dtype, upcast here)
    # mul_ref         : (tb, ts, 128) bf16 tile
    # o_ref           : (ts, 128) output tile (same block across the B axis)
    # acc_ref         : (ts, 128) f32 VMEM accumulator
    b_idx = pl.program_id(1)

    @pl.when(b_idx == 0)
    def _():
        acc_ref[...] = jnp.zeros_like(acc_ref)

    x = x_ref[...].astype(jnp.float32)
    lab = lab_ref[...].astype(jnp.float32)
    mul = mul_ref[...].astype(jnp.float32)

    loss = jnp.abs(x - (1.0 - mul) * lab)
    # reduce the leading (batch) axis of the block: cheap VPU adds, no XLU
    acc_ref[...] += jnp.sum(loss, axis=0)

    @pl.when(b_idx == pl.num_programs(1) - 1)
    def _():
        o_ref[...] = acc_ref[...] * inv_b


def abs_disc_sm_v3_beta(x, labels, key, lb_sm=LB_SM,
                        target_block_elems=512 * 1024, max_tb=8):
    """x, labels: arrays of identical shape (B, ...). Returns mean over dim 0."""
    assert x.shape == labels.shape
    orig_shape = x.shape
    B = orig_shape[0]
    F = int(math.prod(orig_shape[1:])) if len(orig_shape) > 1 else 1

    x2 = x.reshape(B, F)
    lab2 = labels.reshape(B, F)

    # Beta(lb_sm, 1 - lb_sm) multiplier, generated in plain JAX "glue",
    # narrowed to bf16 to cut HBM traffic for the bandwidth-bound kernel.
    mul2 = jax.random.beta(
        key, lb_sm, 1.0 - lb_sm, shape=(B, F), dtype=jnp.float32
    ).astype(jnp.bfloat16)

    # ---- tiling: (B, F) -> (B, S_final, 128) with lane/sublane-dense blocks ----
    S = pl.cdiv(F, 128)
    S8 = _round_up(S, 8)

    tb = _largest_divisor_leq(B, max_tb)                       # batch tile (divides B)
    ts = max(8, (target_block_elems // (tb * 128)) // 8 * 8)    # sublane tile (mult of 8)
    ts = min(ts, S8)
    S_final = _round_up(S, ts)                                  # pad S so ts divides it
    F_final = S_final * 128

    def _pad_reshape(a):
        if F_final != F:
            a = jnp.pad(a, ((0, 0), (0, F_final - F)))          # zero pad: contributes 0
        return a.reshape(B, S_final, 128)

    x3 = _pad_reshape(x2)
    lab3 = _pad_reshape(lab2)
    mul3 = _pad_reshape(mul2)

    grid = (S_final // ts, B // tb)  # feature axis first (parallel), batch last (reduction)

    itemsize = lambda a: a.size * a.dtype.itemsize
    cost = pl.CostEstimate(
        flops=5 * B * F_final,
        transcendentals=0,
        bytes_accessed=itemsize(x3) + itemsize(lab3) + itemsize(mul3) + F_final * 4,
    )

    kernel = functools.partial(_abs_disc_kernel, inv_b=1.0 / B)

    out = pl.pallas_call(
        kernel,
        out_shape=jax.ShapeDtypeStruct((S_final, 128), jnp.float32),
        grid_spec=pltpu.PrefetchScalarGridSpec(
            num_scalar_prefetch=0,
            grid=grid,
            in_specs=[
                pl.BlockSpec((tb, ts, 128), lambda s, b: (b, s, 0)),  # x
                pl.BlockSpec((tb, ts, 128), lambda s, b: (b, s, 0)),  # labels
                pl.BlockSpec((tb, ts, 128), lambda s, b: (b, s, 0)),  # mul (bf16)
            ],
            out_specs=pl.BlockSpec((ts, 128), lambda s, b: (s, 0)),
            scratch_shapes=[pltpu.VMEM((ts, 128), jnp.float32)],
        ),
        compiler_params=pltpu.CompilerParams(
            # feature axis shards across cores (megacore / v7x 2-TC); batch axis
            # is the sequential reduction.
            dimension_semantics=("parallel", "arbitrary"),
            vmem_limit_bytes=32 * 1024 * 1024,
        ),
        cost_estimate=cost,
    )(x3, lab3, mul3)

    out = out.reshape(F_final)[:F]
    return out.reshape(orig_shape[1:])


def _reference(x, labels, mul):
    lab = (1.0 - mul) * labels
    return jnp.mean(jnp.abs(x - lab), axis=0)


if __name__ == "__main__":
    key = jax.random.PRNGKey(0)
    k_x, k_lab, k_beta = jax.random.split(key, 3)

    B, C, H, W = 2, 4, 16, 16
    # inputs must be in [0, 1] per the module's asserts
    x = jax.random.uniform(k_x, (B, C, H, W), dtype=jnp.float32)
    labels = jax.random.uniform(k_lab, (B, C, H, W), dtype=jnp.float32)

    out = abs_disc_sm_v3_beta(x, labels, k_beta)
    out = jax.block_until_ready(out)

    # correctness check against a pure-JAX reference using the same
    # (bf16-rounded) Beta draw the kernel consumed
    F = C * H * W
    mul = jax.random.beta(k_beta, LB_SM, 1.0 - LB_SM, shape=(B, F), dtype=jnp.float32)
    mul = mul.astype(jnp.bfloat16).astype(jnp.float32)
    ref = _reference(x.reshape(B, F), labels.reshape(B, F), mul).reshape(C, H, W)

    assert out.shape == (C, H, W)
    assert jnp.allclose(out, ref, atol=1e-5, rtol=1e-5)

    print("KERNEL_OK")
</pallas_src>

<mosaic_0001>
module attributes {stable_mosaic.version = 11 : i64} {
  func.func @_abs_disc_kernel(%arg0: i32, %arg1: i32, %arg2: memref<2x8x128xf32, #tpu.memory_space<vmem>>, %arg3: memref<2x8x128xf32, #tpu.memory_space<vmem>>, %arg4: memref<2x8x128xbf16, #tpu.memory_space<vmem>>, %arg5: memref<8x128xf32, #tpu.memory_space<vmem>>, %arg6: memref<8x128xf32, #tpu.memory_space<vmem>>) attributes {dimension_semantics = [#tpu.dimension_semantics<parallel>, #tpu.dimension_semantics<arbitrary>], iteration_bounds = array<i64: 1, 1>, scalar_prefetch = 0 : i64, scratch_operands = 1 : i64, tpu.core_type = #tpu.core_type<tc>, window_params = [{transform_indices = @transform_0, window_bounds = array<i64: 2, 8, 128>}, {transform_indices = @transform_1, window_bounds = array<i64: 2, 8, 128>}, {transform_indices = @transform_2, window_bounds = array<i64: 2, 8, 128>}, {transform_indices = @transform_3, window_bounds = array<i64: 8, 128>}]} {
    %c0_i32 = arith.constant 0 : i32
    %0 = arith.cmpi eq, %arg1, %c0_i32 : i32
    %1 = arith.extui %0 : i1 to i32
    %c0_i32_0 = arith.constant 0 : i32
    %2 = arith.cmpi ne, %1, %c0_i32_0 : i32
    scf.if %2 {
      %cst_16 = arith.constant 0.000000e+00 : f32
      %19 = vector.broadcast %cst_16 : f32 to vector<8x128xf32>
      %c0_17 = arith.constant 0 : index
      %c0_18 = arith.constant 0 : index
      %20 = vector.load %arg6[%c0_17, %c0_18] : memref<8x128xf32, #tpu.memory_space<vmem>>, vector<8x128xf32>
      tpu.vector_store %arg6[%c0_17, %c0_18], %19 {strides = array<i32>} : memref<8x128xf32, #tpu.memory_space<vmem>>, vector<8x128xf32>,
    } else {
    }
    %c0 = arith.constant 0 : index
    %c0_1 = arith.constant 0 : index
    %c0_2 = arith.constant 0 : index
    %3 = vector.load %arg2[%c0, %c0_1, %c0_2] : memref<2x8x128xf32, #tpu.memory_space<vmem>>, vector<2x8x128xf32>
    %c0_3 = arith.constant 0 : index
    %c0_4 = arith.constant 0 : index
    %c0_5 = arith.constant 0 : index
    %4 = vector.load %arg3[%c0_3, %c0_4, %c0_5] : memref<2x8x128xf32, #tpu.memory_space<vmem>>, vector<2x8x128xf32>
    %c0_6 = arith.constant 0 : index
    %c0_7 = arith.constant 0 : index
    %c0_8 = arith.constant 0 : index
    %5 = vector.load %arg4[%c0_6, %c0_7, %c0_8] : memref<2x8x128xbf16, #tpu.memory_space<vmem>>, vector<2x8x128xbf16>
    %6 = arith.extf %5 : vector<2x8x128xbf16> to vector<2x8x128xf32>
    %cst = arith.constant 1.000000e+00 : f32
    %7 = vector.broadcast %cst : f32 to vector<2x8x128xf32>
    %8 = arith.subf %7, %6 : vector<2x8x128xf32>
    %9 = arith.mulf %8, %4 : vector<2x8x128xf32>
    %10 = arith.subf %3, %9 : vector<2x8x128xf32>
    %11 = math.absf %10 : vector<2x8x128xf32>
    %c0_9 = arith.constant 0 : index
    %c0_10 = arith.constant 0 : index
    %12 = vector.load %arg6[%c0_9, %c0_10] : memref<8x128xf32, #tpu.memory_space<vmem>>, vector<8x128xf32>
    %cst_11 = arith.constant dense<0.000000e+00> : vector<8x128xf32>
    %13 = vector.multi_reduction <add>, %11, %cst_11 [0] : vector<2x8x128xf32> to vector<8x128xf32>
    %14 = arith.addf %12, %13 : vector<8x128xf32>
    %c0_12 = arith.constant 0 : index
    %c0_13 = arith.constant 0 : index
    %15 = vector.load %arg6[%c0_12, %c0_13] : memref<8x128xf32, #tpu.memory_space<vmem>>, vector<8x128xf32>
    tpu.vector_store %arg6[%c0_12, %c0_13], %14 {strides = array<i32>} : memref<8x128xf32, #tpu.memory_space<vmem>>, vector<8x128xf32>,
    %c0_i32_14 = arith.constant 0 : i32
    %16 = arith.cmpi eq, %arg1, %c0_i32_14 : i32
    %17 = arith.extui %16 : i1 to i32
    %c0_i32_15 = arith.constant 0 : i32
    %18 = arith.cmpi ne, %17, %c0_i32_15 : i32
    scf.if %18 {
      %c0_16 = arith.constant 0 : index
      %c0_17 = arith.constant 0 : index
      %19 = vector.load %arg6[%c0_16, %c0_17] : memref<8x128xf32, #tpu.memory_space<vmem>>, vector<8x128xf32>
      %cst_18 = arith.constant 5.000000e-01 : f32
      %20 = vector.broadcast %cst_18 : f32 to vector<8x128xf32>
      %21 = arith.mulf %19, %20 : vector<8x128xf32>
      %c0_19 = arith.constant 0 : index
      %c0_20 = arith.constant 0 : index
      %22 = vector.load %arg5[%c0_19, %c0_20] : memref<8x128xf32, #tpu.memory_space<vmem>>, vector<8x128xf32>
      tpu.vector_store %arg5[%c0_19, %c0_20], %21 {strides = array<i32>} : memref<8x128xf32, #tpu.memory_space<vmem>>, vector<8x128xf32>,
    } else {
    }
    return
  }
  func.func @transform_0(%arg0: i32, %arg1: i32) -> (i32, i32, i32) {
    %c0_i32 = arith.constant 0 : i32
    %c0_i32_0 = arith.constant 0 : i32
    return %arg1, %arg0, %c0_i32 : i32, i32, i32
  }
  func.func @transform_1(%arg0: i32, %arg1: i32) -> (i32, i32, i32) {
    %c0_i32 = arith.constant 0 : i32
    %c0_i32_0 = arith.constant 0 : i32
    return %arg1, %arg0, %c0_i32 : i32, i32, i32
  }
  func.func @transform_2(%arg0: i32, %arg1: i32) -> (i32, i32, i32) {
    %c0_i32 = arith.constant 0 : i32
    %c0_i32_0 = arith.constant 0 : i32
    return %arg1, %arg0, %c0_i32 : i32, i32, i32
  }
  func.func @transform_3(%arg0: i32, %arg1: i32) -> (i32, i32) {
    %c0_i32 = arith.constant 0 : i32
    %c0_i32_0 = arith.constant 0 : i32
    return %arg0, %c0_i32 : i32, i32
  }
}

</mosaic_0001>

<llo_original>
// kernel: tpu_custom_call.1
$region0: #{tpu_custom_call.1}
  #allocation0 [shape = 'u32[]', space=smem, size = 0x4, offset = 0x4, fixed_abs, tag = 'smem constant byte address 0x4 - core index']
  #allocation1 [shape = 'u32[144,128]{1,0:T(1,128)}', space=vmem, size = 0x12000, scoped, tag = 'internal scratch']
  #allocation2 [shape = 'f32[8,128]{1,0:T(8,128)}', space=vmem, size = 0x1000, scoped, tag = 'scratch operand']
  %s0 = inlined_call_operand.hbm [shape: f32[2,8,128], index: 0, kind: input, shape index: {}]
  %s1 = inlined_call_operand.hbm [shape: f32[2,8,128], index: 1, kind: input, shape index: {}]
  %s2 = inlined_call_operand.hbm [shape: bf16[2,8,128], index: 2, kind: input, shape index: {}]
  %s3 = inlined_call_operand.hbm [shape: f32[8,128], index: 3, kind: output, shape index: {}]
  %s4 = sld [smem:[#allocation0]]
  $region42: #{tpu_custom_call.1} parent=0
    _
  %s6 = ssub.s32 1, %s4
  %s7 = scalar_select 0, %s6, %s4
  $region1: #{tpu_custom_call.1} parent=0
    #allocation3 [shape = 'u8[8192]{0}', space=vmem, size = 0x2000, scoped, tag = 'input window, operand 0, single buffered']
    #allocation4 [shape = 's32[1]{0}', space=sflag, size = 0x4, scoped, tag = 'scoped memory for tpu_custom_call.1']
    #allocation5 [shape = 's32[1]{0}', space=sflag, size = 0x4, scoped, tag = 'scoped memory for tpu_custom_call.1']
    #allocation6 [shape = 'u8[8192]{0}', space=vmem, size = 0x2000, scoped, tag = 'input window, operand 1, single buffered']
    #allocation7 [shape = 's32[1]{0}', space=sflag, size = 0x4, scoped, tag = 'scoped memory for tpu_custom_call.1']
    #allocation8 [shape = 'u8[4096]{0}', space=vmem, size = 0x1000, scoped, tag = 'input window, operand 2, single buffered']
    #allocation9 [shape = 'u8[4096]{0}', space=vmem, size = 0x1000, scoped, tag = 'output window, operand 0, single buffered']
    %8 = vsyncpa [#allocation4], 0
    %9 = vsyncpa [#allocation7], 0
    %10 = vsyncpa [#allocation5], 0
    // Predicated region
    $region2: #{tpu_custom_call.1} parent=1 // pred_check
      _
    $region3: #{tpu_custom_call.1} parent=1 // pred_check_branch
      %12 = sbr.rel (0) target = $region5
    $region4: #{tpu_custom_call.1} parent=1 // pred_region
      %s14 = ssub.s32 256, 256
      %15 = vsyncadd [#allocation4], %s14
      %s16 = sshll.u32 [#allocation3], 4
      %s17 = int_to_ptr.vmem [resolvable:$true] %s16
      %22 = dma.hbm_to_vmem [thread:$0]  %s0, 256, %s17, [#allocation4], 128, 128, 8
    $region5: #{tpu_custom_call.1} parent=1 // pred_fallthru
      _
    // Predicated region
    $region6: #{tpu_custom_call.1} parent=1 // pred_check
      _
    $region7: #{tpu_custom_call.1} parent=1 // pred_check_branch
      %24 = sbr.rel (0) target = $region9
    $region8: #{tpu_custom_call.1} parent=1 // pred_region
      %s26 = ssub.s32 256, 256
      %27 = vsyncadd [#allocation7], %s26
      %s28 = sshll.u32 [#allocation6], 4
      %s29 = int_to_ptr.vmem [resolvable:$true] %s28
      %34 = dma.hbm_to_vmem [thread:$0]  %s1, 256, %s29, [#allocation7], 128, 128, 8
    $region9: #{tpu_custom_call.1} parent=1 // pred_fallthru
      _
    // Predicated region
    $region10: #{tpu_custom_call.1} parent=1 // pred_check
      _
    $region11: #{tpu_custom_call.1} parent=1 // pred_check_branch
      %36 = sbr.rel (0) target = $region13
    $region12: #{tpu_custom_call.1} parent=1 // pred_region
      %s38 = ssub.s32 128, 128
      %39 = vsyncadd [#allocation7], %s38
      %s40 = sshll.u32 [#allocation8], 4
      %s41 = int_to_ptr.vmem [resolvable:$true] %s40
      %46 = dma.hbm_to_vmem [thread:$0]  %s2, 128, %s41, [#allocation7], 64, 64, 4
    $region13: #{tpu_custom_call.1} parent=1 // pred_fallthru
      _
    // Predicated region
    $region14: #{tpu_custom_call.1} parent=1 // pred_check
      _
    $region15: #{tpu_custom_call.1} parent=1 // pred_check_branch
      %48 = sbr.rel (0) target = $region17
    $region16: #{tpu_custom_call.1} parent=1 // pred_region
      %49 = dma.done [#allocation4], 256
    $region17: #{tpu_custom_call.1} parent=1 // pred_fallthru
      _
    // Predicated region
    $region18: #{tpu_custom_call.1} parent=1 // pred_check
      _
    $region19: #{tpu_custom_call.1} parent=1 // pred_check_branch
      %51 = sbr.rel (0) target = $region21
    $region20: #{tpu_custom_call.1} parent=1 // pred_region
      %52 = dma.done [#allocation7], 256
    $region21: #{tpu_custom_call.1} parent=1 // pred_fallthru
      _
    // Predicated region
    $region22: #{tpu_custom_call.1} parent=1 // pred_check
      _
    $region23: #{tpu_custom_call.1} parent=1 // pred_check_branch
      %54 = sbr.rel (0) target = $region25
    $region24: #{tpu_custom_call.1} parent=1 // pred_region
      %55 = dma.done [#allocation7], 128
    $region25: #{tpu_custom_call.1} parent=1 // pred_fallthru
      _
    %p56 = scmp.eq.s32.totalorder 0, 0
    // Predicated region
    $region26: #{tpu_custom_call.1} parent=1 // pred_check
      %p57 = pneg %p56
    $region27: #{tpu_custom_call.1} parent=1 // pred_check_branch
      %59 = sbr.rel (%p57) target = $region29
    $region28: #{tpu_custom_call.1} parent=1 // pred_region
      %60 = vst [vmem:[#allocation2] sm:$0xff] 0.0
    $region29: #{tpu_custom_call.1} parent=1 // pred_fallthru
      _
    %v61 = vld [vmem:[#allocation3] sm:$0xff]
    %v62 = vld [vmem:[#allocation3 + $0x8] sm:$0xff]
    %v63 = vld [vmem:[#allocation6] sm:$0xff]
    %v64 = vld [vmem:[#allocation6 + $0x8] sm:$0xff]
    %v65 = vld [vmem:[#allocation8] sm:$0xf]
    %v66 = vld [vmem:[#allocation8 + $0x4] sm:$0xf]
    %v67 = vunpack.c.l.bf16 %v65
    %v68 = vunpack.c.l.bf16 %v66
    %v69 = vsub.f32 1.0, %v67
    %v70 = vsub.f32 1.0, %v68
    %v71 = vmul.f32 %v69, %v63
    %v72 = vmul.f32 %v70, %v64
    %v73 = vsub.f32 %v61, %v71
    %v74 = vsub.f32 %v62, %v72
    %v75 = vand.u32 2147483647, %v73
    %v76 = vand.u32 2147483647, %v74
    %v77 = vld [vmem:[#allocation2] sm:$0xff]
    %v78 = vadd.f32 %v75, %v76
    %v79 = vadd.f32 %v77, %v78
    %80 = vst [vmem:[#allocation2] sm:$0xff] %v79
    // Predicated region
    $region30: #{tpu_custom_call.1} parent=1 // pred_check
      %p81 = pneg %p56
    $region31: #{tpu_custom_call.1} parent=1 // pred_check_branch
      %83 = sbr.rel (%p81) target = $region33
    $region32: #{tpu_custom_call.1} parent=1 // pred_region
      %v84 = vld [vmem:[#allocation2] sm:$0xff]
      %v85 = vmul.f32 %v84, 0.5
      %86 = vst [vmem:[#allocation9] sm:$0xff] %v85
    $region33: #{tpu_custom_call.1} parent=1 // pred_fallthru
      _
    // Predicated region
    $region34: #{tpu_custom_call.1} parent=1 // pred_check
      _
    $region35: #{tpu_custom_call.1} parent=1 // pred_check_branch
      %88 = sbr.rel (0) target = $region37
    $region36: #{tpu_custom_call.1} parent=1 // pred_region
      %s90 = ssub.s32 128, 128
      %91 = vsyncadd [#allocation5], %s90
      %s93 = sshll.u32 [#allocation9], 4
      %s94 = int_to_ptr.vmem [resolvable:$true] %s93
      %96 = dma.vmem_to_hbm [thread:$0]  %s94, 128, %s3, [#allocation5]
    $region37: #{tpu_custom_call.1} parent=1 // pred_fallthru
      _
    // Predicated region
    $region38: #{tpu_custom_call.1} parent=1 // pred_check
      _
    $region39: #{tpu_custom_call.1} parent=1 // pred_check_branch
      %98 = sbr.rel (0) target = $region41
    $region40: #{tpu_custom_call.1} parent=1 // pred_region
      %99 = dma.done [#allocation5], 128
    $region41: #{tpu_custom_call.1} parent=1 // pred_fallthru
      _
    %100 = vsyncpa [#allocation4], 1
    %101 = vsyncpa [#allocation7], 1
    %102 = vsyncpa [#allocation5], 1

</llo_original>
